<compile_context>
chip_gen: v7x
topology: tpu7x:2x2x1
jax: 0.10.0
libtpu: 0.0.40
codegen_flags: <defaults>
</compile_context>

<pallas_src>
import functools

import jax
import jax.numpy as jnp
from jax import lax
from jax.experimental import pallas as pl
from jax.experimental.pallas import tpu as pltpu

LANE = 128
SUBLANE = 8


def _round_up(x, m):
    return ((x + m - 1) // m) * m


def _device_kind():
    try:
        return jax.devices()[0].device_kind.lower()
    except Exception:
        return ""


def _is_v5e():
    k = _device_kind()
    return ("v5e" in k) or ("v5 lite" in k) or ("v5litepod" in k)


def _num_tensorcores_per_chip():
    k = _device_kind()
    return 2 if ("v7" in k or "tpu7" in k or "7x" in k) else 1


# ---------------------------------------------------------------------------
# Kernels
# ---------------------------------------------------------------------------
def dqn_kernel(x_ref, w1_ref, b1_ref, w2_ref, b2_ref, out_ref, *, bf16_elementwise):
    # hidden = tanh(x @ W1 + b1): MXU matmul with f32 accumulation.
    h = jnp.dot(x_ref[...], w1_ref[...], preferred_element_type=jnp.float32)
    if bf16_elementwise:
        # v6e/v7x: bf16 EUP tanh (halves the transcendental work, drops one cast pass).
        h = jnp.tanh((h + b1_ref[...]).astype(jnp.bfloat16))
    else:
        # v5e has no bf16 VPU/EUP: keep elementwise in f32.
        h = jnp.tanh(h + b1_ref[...])
    # q = hidden @ W2 + b2 -> lane-dense 128-wide tile; cast to output dtype (bf16 on the
    # fast path) so the dominant HBM writeback is as small as possible.
    q = jnp.dot(h.astype(w2_ref.dtype), w2_ref[...], preferred_element_type=jnp.float32)
    out_ref[...] = (q + b2_ref[...]).astype(out_ref.dtype)


def dqn_act_kernel(x_ref, w1_ref, b1_ref, w2_ref, b2_ref, action_ref, *, n_out):
    # Single-observation greedy action, fully fused: forward + argmax reduced in-kernel,
    # only a (1,1) int32 scalar leaves the kernel (SMEM output, no padded Q writeback).
    h = jnp.dot(x_ref[...], w1_ref[...], preferred_element_type=jnp.float32)
    h = jnp.tanh(h + b1_ref[...])
    q = jnp.dot(h.astype(w2_ref.dtype), w2_ref[...], preferred_element_type=jnp.float32)
    q = q + b2_ref[...]                                      # (8, o_pad); only row 0 is real
    col = lax.broadcasted_iota(jnp.int32, q.shape, 1)
    row = lax.broadcasted_iota(jnp.int32, q.shape, 0)
    valid = (col < n_out) & (row == 0)
    qm = jnp.where(valid, q, -jnp.inf)                       # padded lanes can never win
    max_val = jnp.max(qm)
    idx = jnp.min(jnp.where(valid & (qm >= max_val), col, n_out))
    action_ref[0, 0] = idx.astype(jnp.int32)


# ---------------------------------------------------------------------------
# Parameter packing (done once at init; exact math)
# ---------------------------------------------------------------------------
def pad_params(w1, b1, w2, b2, matmul_dtype=jnp.bfloat16):
    """Zero-pad hidden -> 128 and n_out -> 128 (lane-dense). Exact: tanh(0)=0 meets zero
    W2 rows; padded Q columns are masked/sliced before any argmax."""
    n_in, hidden = w1.shape
    n_out = w2.shape[1]
    h_pad = _round_up(hidden, LANE)
    o_pad = _round_up(n_out, LANE)
    w1_p = jnp.zeros((n_in, h_pad), matmul_dtype).at[:, :hidden].set(w1.astype(matmul_dtype))
    b1_p = jnp.zeros((1, h_pad), jnp.float32).at[:, :hidden].set(
        b1.reshape(1, hidden).astype(jnp.float32))
    w2_p = jnp.zeros((h_pad, o_pad), matmul_dtype).at[:hidden, :n_out].set(w2.astype(matmul_dtype))
    b2_p = jnp.zeros((1, o_pad), jnp.float32).at[:, :n_out].set(
        b2.reshape(1, n_out).astype(jnp.float32))
    return (w1_p, b1_p, w2_p, b2_p), n_out


# ---------------------------------------------------------------------------
# Forward wrapper
# ---------------------------------------------------------------------------
def dqn_forward(x, padded_params, n_out, *, max_tile_b=2048, out_dtype=None):
    """x: (B, n_input) -> (B, n_out); same math as nn.Sequential(Linear, Tanh, Linear).
    Output dtype defaults to bf16 on the bf16-weight path (halves the binding HBM write)
    and f32 on the f32 path."""
    w1_p, b1_p, w2_p, b2_p = padded_params
    B, n_in = x.shape
    h_pad = w1_p.shape[1]
    o_pad = w2_p.shape[1]
    matmul_dtype = w1_p.dtype
    if out_dtype is None:
        out_dtype = jnp.bfloat16 if matmul_dtype == jnp.bfloat16 else jnp.float32

    # Sublane granularity: 16 for bf16 tiles (packed sublane pairs), 8 otherwise.
    sub = 16 if (matmul_dtype == jnp.bfloat16 or out_dtype == jnp.bfloat16) else SUBLANE

    # Tile plan: bound padding to a few sublanes; keep >=2 tiles on 2-TC chips (v7x) so
    # both TensorCores get a batch shard; tile_b is always a sublane multiple regardless
    # of the caller-supplied max_tile_b.
    num_tiles = max(1, pl.cdiv(B, max(1, max_tile_b)))
    if B >= 2 * SUBLANE:
        num_tiles = max(num_tiles, _num_tensorcores_per_chip())
    tile_b = max(sub, _round_up(pl.cdiv(B, num_tiles), sub))
    num_tiles = pl.cdiv(B, tile_b)
    b_pad = num_tiles * tile_b

    x_p = jnp.zeros((b_pad, n_in), matmul_dtype).at[:B].set(x.astype(matmul_dtype))

    bf16_elementwise = (matmul_dtype == jnp.bfloat16) and not _is_v5e()

    q_padded = pl.pallas_call(
        functools.partial(dqn_kernel, bf16_elementwise=bf16_elementwise),
        out_shape=jax.ShapeDtypeStruct((b_pad, o_pad), out_dtype),
        grid=(num_tiles,),
        in_specs=[
            pl.BlockSpec((tile_b, n_in), lambda i: (i, 0)),  # x: streamed over batch tiles
            pl.BlockSpec((n_in, h_pad), lambda i: (0, 0)),   # weights/biases: VMEM-resident
            pl.BlockSpec((1, h_pad), lambda i: (0, 0)),
            pl.BlockSpec((h_pad, o_pad), lambda i: (0, 0)),
            pl.BlockSpec((1, o_pad), lambda i: (0, 0)),
        ],
        out_specs=pl.BlockSpec((tile_b, o_pad), lambda i: (i, 0)),
        compiler_params=pltpu.CompilerParams(
            dimension_semantics=("parallel",),      # batch shards across TCs on v7x
            vmem_limit_bytes=32 * 1024 * 1024,      # safe on v5e/v6e (128 MiB) and v7x (64 MiB)
        ),
    )(x_p, w1_p, b1_p, w2_p, b2_p)

    # Slice off batch + lane padding BEFORE any consumer so padded Q columns never leak.
    return q_padded[:B, :n_out]


def act(obs, padded_params, n_out):
    """DQN.act equivalent: greedy action for one observation. Fully fused forward+argmax,
    returns a device int32 scalar (no forced host sync; call int(...) only if needed)."""
    w1_p, b1_p, w2_p, b2_p = padded_params
    n_in = w1_p.shape[0]
    matmul_dtype = w1_p.dtype
    x = jnp.zeros((SUBLANE, n_in), matmul_dtype).at[0].set(
        obs.reshape(-1).astype(matmul_dtype))
    action = pl.pallas_call(
        functools.partial(dqn_act_kernel, n_out=n_out),
        out_shape=jax.ShapeDtypeStruct((1, 1), jnp.int32),
        in_specs=[pl.BlockSpec(memory_space=pltpu.MemorySpace.VMEM)] * 5,
        out_specs=pl.BlockSpec(memory_space=pltpu.MemorySpace.SMEM),
        compiler_params=pltpu.CompilerParams(vmem_limit_bytes=32 * 1024 * 1024),
    )(x, w1_p, b1_p, w2_p, b2_p)
    return action[0, 0]


def init_dqn_params(key, n_input, n_output, hidden=64):
    """PyTorch nn.Linear-style init: U[-1/sqrt(fan_in), 1/sqrt(fan_in)]."""
    k1, k2, k3, k4 = jax.random.split(key, 4)
    bound1 = 1.0 / jnp.sqrt(jnp.float32(n_input))
    bound2 = 1.0 / jnp.sqrt(jnp.float32(hidden))
    w1 = jax.random.uniform(k1, (n_input, hidden), jnp.float32, -bound1, bound1)
    b1 = jax.random.uniform(k2, (hidden,), jnp.float32, -bound1, bound1)
    w2 = jax.random.uniform(k3, (hidden, n_output), jnp.float32, -bound2, bound2)
    b2 = jax.random.uniform(k4, (n_output,), jnp.float32, -bound2, bound2)
    return w1, b1, w2, b2


if __name__ == "__main__":
    key = jax.random.PRNGKey(0)
    k_x, k_p, k_big = jax.random.split(key, 3)

    # Small shapes consistent with a DQN over a low-dim observation space.
    batch, n_input, n_output = 2, 8, 4
    x = jax.random.normal(k_x, (batch, n_input), jnp.float32)
    w1, b1, w2, b2 = init_dqn_params(k_p, n_input, n_output)

    ref = jnp.tanh(x @ w1 + b1) @ w2 + b2

    # f32 matmul + f32 output path: tight check against plain-JAX reference.
    params_f32, n_out = pad_params(w1, b1, w2, b2, matmul_dtype=jnp.float32)
    q_f32 = jax.block_until_ready(dqn_forward(x, params_f32, n_out))
    assert q_f32.shape == (batch, n_output) and q_f32.dtype == jnp.float32
    assert jnp.allclose(q_f32, ref, atol=1e-5, rtol=1e-5)

    # bf16 matmul + bf16 output path (fast path on v6e/v7x): loose check vs f32 reference.
    params_bf16, _ = pad_params(w1, b1, w2, b2, matmul_dtype=jnp.bfloat16)
    q_bf16 = jax.block_until_ready(dqn_forward(x, params_bf16, n_out))
    assert q_bf16.shape == (batch, n_output)
    assert jnp.allclose(q_bf16.astype(jnp.float32), ref, atol=5e-2, rtol=5e-2)

    # Multi-tile grid path: B=300 (not a multiple of 8 or the tile) exercises bounded
    # padding, grid > 1 and the software pipeline, in both f32 and bf16 flavors.
    xb = jax.random.normal(k_big, (300, n_input), jnp.float32)
    ref_big = jnp.tanh(xb @ w1 + b1) @ w2 + b2
    q_big = jax.block_until_ready(dqn_forward(xb, params_f32, n_out, max_tile_b=128))
    assert q_big.shape == (300, n_output)
    assert jnp.allclose(q_big, ref_big, atol=1e-5, rtol=1e-5)
    q_big16 = jax.block_until_ready(dqn_forward(xb, params_bf16, n_out, max_tile_b=128))
    assert q_big16.shape == (300, n_output)
    assert jnp.allclose(q_big16.astype(jnp.float32), ref_big, atol=5e-2, rtol=5e-2)

    # Fused greedy action (DQN.act): in-kernel argmax over the real n_out Q-values only.
    a_dev = jax.block_until_ready(act(x[0], params_f32, n_out))
    a = int(a_dev)  # single host read here is test-only; rollouts can keep it on device
    assert 0 <= a < n_output
    assert float(ref[0, a]) >= float(jnp.max(ref[0])) - 1e-4

    print("KERNEL_OK")
</pallas_src>

<mosaic_0001>
module attributes {stable_mosaic.version = 11 : i64} {
  func.func @dqn_kernel(%arg0: i32, %arg1: memref<8x8xf32, #tpu.memory_space<vmem>>, %arg2: memref<8x128xf32, #tpu.memory_space<vmem>>, %arg3: memref<1x128xf32, #tpu.memory_space<vmem>>, %arg4: memref<128x128xf32, #tpu.memory_space<vmem>>, %arg5: memref<1x128xf32, #tpu.memory_space<vmem>>, %arg6: memref<8x128xf32, #tpu.memory_space<vmem>>) attributes {dimension_semantics = [#tpu.dimension_semantics<parallel>], iteration_bounds = array<i64: 1>, scalar_prefetch = 0 : i64, scratch_operands = 0 : i64, tpu.core_type = #tpu.core_type<tc>, window_params = [{transform_indices = @transform_0, window_bounds = array<i64: 8, 8>}, {pipeline_mode = #tpu.pipeline_mode<synchronous>, transform_indices = @transform_1, window_bounds = array<i64: 8, 128>}, {pipeline_mode = #tpu.pipeline_mode<synchronous>, transform_indices = @transform_2, window_bounds = array<i64: 1, 128>}, {pipeline_mode = #tpu.pipeline_mode<synchronous>, transform_indices = @transform_3, window_bounds = array<i64: 128, 128>}, {pipeline_mode = #tpu.pipeline_mode<synchronous>, transform_indices = @transform_4, window_bounds = array<i64: 1, 128>}, {transform_indices = @transform_5, window_bounds = array<i64: 8, 128>}]} {
    %c0 = arith.constant 0 : index
    %c0_0 = arith.constant 0 : index
    %0 = vector.load %arg1[%c0, %c0_0] : memref<8x8xf32, #tpu.memory_space<vmem>>, vector<8x8xf32>
    %c0_1 = arith.constant 0 : index
    %c0_2 = arith.constant 0 : index
    %1 = vector.load %arg2[%c0_1, %c0_2] : memref<8x128xf32, #tpu.memory_space<vmem>>, vector<8x128xf32>
    %cst = arith.constant dense<0.000000e+00> : vector<8x128xf32>
    %2 = tpu.matmul %0, %1, %cst {dimension_numbers = #tpu.dot_dimension_numbers<[1], [0], [0], [1], [0, 0, 1, 1], [], []>} : vector<8x8xf32>, vector<8x128xf32>, vector<8x128xf32> -> vector<8x128xf32>
    %c0_3 = arith.constant 0 : index
    %c0_4 = arith.constant 0 : index
    %3 = vector.load %arg3[%c0_3, %c0_4] : memref<1x128xf32, #tpu.memory_space<vmem>>, vector<1x128xf32>
    %4 = vector.broadcast %3 : vector<1x128xf32> to vector<8x128xf32>
    %5 = arith.addf %2, %4 : vector<8x128xf32>
    %6 = math.tanh %5 : vector<8x128xf32>
    %c0_5 = arith.constant 0 : index
    %c0_6 = arith.constant 0 : index
    %7 = vector.load %arg4[%c0_5, %c0_6] : memref<128x128xf32, #tpu.memory_space<vmem>>, vector<128x128xf32>
    %cst_7 = arith.constant dense<0.000000e+00> : vector<8x128xf32>
    %8 = tpu.matmul %6, %7, %cst_7 {dimension_numbers = #tpu.dot_dimension_numbers<[1], [0], [0], [1], [0, 0, 1, 1], [], []>} : vector<8x128xf32>, vector<128x128xf32>, vector<8x128xf32> -> vector<8x128xf32>
    %c0_8 = arith.constant 0 : index
    %c0_9 = arith.constant 0 : index
    %9 = vector.load %arg5[%c0_8, %c0_9] : memref<1x128xf32, #tpu.memory_space<vmem>>, vector<1x128xf32>
    %10 = vector.broadcast %9 : vector<1x128xf32> to vector<8x128xf32>
    %11 = arith.addf %8, %10 : vector<8x128xf32>
    %c0_10 = arith.constant 0 : index
    %c0_11 = arith.constant 0 : index
    %12 = vector.load %arg6[%c0_10, %c0_11] : memref<8x128xf32, #tpu.memory_space<vmem>>, vector<8x128xf32>
    tpu.vector_store %arg6[%c0_10, %c0_11], %11 {strides = array<i32>} : memref<8x128xf32, #tpu.memory_space<vmem>>, vector<8x128xf32>,
    return
  }
  func.func @transform_0(%arg0: i32) -> (i32, i32) {
    %c0_i32 = arith.constant 0 : i32
    %c0_i32_0 = arith.constant 0 : i32
    return %arg0, %c0_i32 : i32, i32
  }
  func.func @transform_1(%arg0: i32) -> (i32, i32) {
    %c0_i32 = arith.constant 0 : i32
    %c0_i32_0 = arith.constant 0 : i32
    %c0_i32_1 = arith.constant 0 : i32
    return %c0_i32, %c0_i32_0 : i32, i32
  }
  func.func @transform_2(%arg0: i32) -> (i32, i32) {
    %c0_i32 = arith.constant 0 : i32
    %c0_i32_0 = arith.constant 0 : i32
    %c0_i32_1 = arith.constant 0 : i32
    return %c0_i32, %c0_i32_0 : i32, i32
  }
  func.func @transform_3(%arg0: i32) -> (i32, i32) {
    %c0_i32 = arith.constant 0 : i32
    %c0_i32_0 = arith.constant 0 : i32
    %c0_i32_1 = arith.constant 0 : i32
    return %c0_i32, %c0_i32_0 : i32, i32
  }
  func.func @transform_4(%arg0: i32) -> (i32, i32) {
    %c0_i32 = arith.constant 0 : i32
    %c0_i32_0 = arith.constant 0 : i32
    %c0_i32_1 = arith.constant 0 : i32
    return %c0_i32, %c0_i32_0 : i32, i32
  }
  func.func @transform_5(%arg0: i32) -> (i32, i32) {
    %c0_i32 = arith.constant 0 : i32
    %c0_i32_0 = arith.constant 0 : i32
    return %arg0, %c0_i32 : i32, i32
  }
}

</mosaic_0001>

<llo_original>
// kernel: tpu_custom_call.1
$region0: #{tpu_custom_call.1}
  #allocation0 [shape = 'u32[]', space=smem, size = 0x4, offset = 0x4, fixed_abs, tag = 'smem constant byte address 0x4 - core index']
  #allocation1 [shape = 'u32[144,128]{1,0:T(1,128)}', space=vmem, size = 0x12000, scoped, tag = 'internal scratch']
  %s0 = inlined_call_operand.hbm [shape: f32[8,8], index: 0, kind: input, shape index: {}]
  %s1 = inlined_call_operand.hbm [shape: f32[8,128], index: 1, kind: input, shape index: {}]
  %s2 = inlined_call_operand.vmem [shape: f32[1,128], index: 2, kind: input, shape index: {}]
  %s3 = inlined_call_operand.hbm [shape: f32[128,128], index: 3, kind: input, shape index: {}]
  %s4 = inlined_call_operand.vmem [shape: f32[1,128], index: 4, kind: input, shape index: {}]
  %s5 = inlined_call_operand.hbm [shape: f32[8,128], index: 5, kind: output, shape index: {}]
  %s6 = sld [smem:[#allocation0]]
  $region42: #{tpu_custom_call.1} parent=0
    _
  %s8 = ssub.s32 1, %s6
  %s9 = scalar_select 0, %s8, %s6
  $region1: #{tpu_custom_call.1} parent=0
    #allocation2 [shape = 'u8[4096]{0}', space=vmem, size = 0x1000, scoped, tag = 'input window, operand 0, single buffered']
    #allocation3 [shape = 's32[1]{0}', space=sflag, size = 0x4, scoped, tag = 'scoped memory for tpu_custom_call.1']
    #allocation4 [shape = 's32[1]{0}', space=sflag, size = 0x4, scoped, tag = 'scoped memory for tpu_custom_call.1']
    #allocation5 [shape = 'u8[4096]{0}', space=vmem, size = 0x1000, scoped, tag = 'input window, operand 1, single buffered']
    #allocation6 [shape = 's32[1]{0}', space=sflag, size = 0x4, scoped, tag = 'scoped memory for tpu_custom_call.1']
    #allocation7 [shape = 'u8[65536]{0}', space=vmem, size = 0x10000, scoped, tag = 'input window, operand 3, single buffered']
    #allocation8 [shape = 'u8[4096]{0}', space=vmem, size = 0x1000, scoped, tag = 'output window, operand 0, single buffered']
    %10 = vsyncpa [#allocation3], 0
    %11 = vsyncpa [#allocation6], 0
    %12 = vsyncpa [#allocation4], 0
    // Predicated region
    $region2: #{tpu_custom_call.1} parent=1 // pred_check
      _
    $region3: #{tpu_custom_call.1} parent=1 // pred_check_branch
      %14 = sbr.rel (0) target = $region5
    $region4: #{tpu_custom_call.1} parent=1 // pred_region
      %s16 = ssub.s32 128, 128
      %17 = vsyncadd [#allocation3], %s16
      %s19 = sshll.u32 [#allocation2], 4
      %s20 = int_to_ptr.vmem [resolvable:$true] %s19
      %22 = dma.hbm_to_vmem [thread:$0]  %s0, 128, %s20, [#allocation3]
    $region5: #{tpu_custom_call.1} parent=1 // pred_fallthru
      _
    // Predicated region
    $region6: #{tpu_custom_call.1} parent=1 // pred_check
      _
    $region7: #{tpu_custom_call.1} parent=1 // pred_check_branch
      %24 = sbr.rel (0) target = $region9
    $region8: #{tpu_custom_call.1} parent=1 // pred_region
      %s26 = ssub.s32 128, 128
      %27 = vsyncadd [#allocation6], %s26
      %s29 = sshll.u32 [#allocation5], 4
      %s30 = int_to_ptr.vmem [resolvable:$true] %s29
      %32 = dma.hbm_to_vmem [thread:$0]  %s1, 128, %s30, [#allocation6]
    $region9: #{tpu_custom_call.1} parent=1 // pred_fallthru
      _
    // Predicated region
    $region10: #{tpu_custom_call.1} parent=1 // pred_check
      _
    $region11: #{tpu_custom_call.1} parent=1 // pred_check_branch
      %34 = sbr.rel (0) target = $region13
    $region12: #{tpu_custom_call.1} parent=1 // pred_region
      _
    $region13: #{tpu_custom_call.1} parent=1 // pred_fallthru
      _
    // Predicated region
    $region14: #{tpu_custom_call.1} parent=1 // pred_check
      _
    $region15: #{tpu_custom_call.1} parent=1 // pred_check_branch
      %36 = sbr.rel (0) target = $region17
    $region16: #{tpu_custom_call.1} parent=1 // pred_region
      %s38 = ssub.s32 2048, 2048
      %39 = vsyncadd [#allocation6], %s38
      %s40 = sshll.u32 [#allocation7], 4
      %s41 = int_to_ptr.vmem [resolvable:$true] %s40
      %46 = dma.hbm_to_vmem [thread:$0]  %s3, 2048, %s41, [#allocation6], 128, 128, 8
    $region17: #{tpu_custom_call.1} parent=1 // pred_fallthru
      _
    // Predicated region
    $region18: #{tpu_custom_call.1} parent=1 // pred_check
      _
    $region19: #{tpu_custom_call.1} parent=1 // pred_check_branch
      %48 = sbr.rel (0) target = $region21
    $region20: #{tpu_custom_call.1} parent=1 // pred_region
      _
    $region21: #{tpu_custom_call.1} parent=1 // pred_fallthru
      _
    // Predicated region
    $region22: #{tpu_custom_call.1} parent=1 // pred_check
      _
    $region23: #{tpu_custom_call.1} parent=1 // pred_check_branch
      %50 = sbr.rel (0) target = $region25
    $region24: #{tpu_custom_call.1} parent=1 // pred_region
      %51 = dma.done [#allocation3], 128
    $region25: #{tpu_custom_call.1} parent=1 // pred_fallthru
      _
    // Predicated region
    $region26: #{tpu_custom_call.1} parent=1 // pred_check
      _
    $region27: #{tpu_custom_call.1} parent=1 // pred_check_branch
      %53 = sbr.rel (0) target = $region29
    $region28: #{tpu_custom_call.1} parent=1 // pred_region
      %54 = dma.done [#allocation6], 128
    $region29: #{tpu_custom_call.1} parent=1 // pred_fallthru
      _
    // Predicated region
    $region30: #{tpu_custom_call.1} parent=1 // pred_check
      _
    $region31: #{tpu_custom_call.1} parent=1 // pred_check_branch
      %56 = sbr.rel (0) target = $region33
    $region32: #{tpu_custom_call.1} parent=1 // pred_region
      %57 = dma.done [#allocation6], 2048
    $region33: #{tpu_custom_call.1} parent=1 // pred_fallthru
      _
    %v58 = vld [vmem:[#allocation2] sm:$0xff]
    %v59 = vld [vmem:[#allocation5] sm:$0xff]
    %v60 = vld [vmem:[%s2] sm:$0x1]
    %v62 = vlaneseq
    %v63 = vshrl.u32 %v62, 7
    %v64 = vsub.s32 0, %v63
    %v65 = vrot.slane %v60, %v64
    %vm67 = vcmask 64512
    %v69 = vsel %vm67, %v58, 0
    %71 = vmatprep.subr.mxu0 0.0
    %72 = vmatpush1.msra.mxu0 %v59
    %73 = vmatprep.subr.mxu0 0.0
    %74 = vmatpush1.msra.mxu0 0.0
    %75 = vmatprep.subr.mxu0 0.0
    %76 = vmatpush1.msra.mxu0 0.0
    %77 = vmatprep.subr.mxu0 0.0
    %78 = vmatpush1.msra.mxu0 0.0
    %79 = vmatprep.subr.mxu0 0.0
    %80 = vmatpush1.msra.mxu0 0.0
    %81 = vmatprep.subr.mxu0 0.0
    %82 = vmatpush1.msra.mxu0 0.0
    %83 = vmatprep.subr.mxu0 0.0
    %84 = vmatpush1.msra.mxu0 0.0
    %85 = vmatprep.subr.mxu0 0.0
    %86 = vmatpush1.msra.mxu0 0.0
    %87 = vmatprep.subr.mxu0 0.0
    %88 = vmatpush1.msra.mxu0 0.0
    %89 = vmatprep.subr.mxu0 0.0
    %90 = vmatpush1.msra.mxu0 0.0
    %91 = vmatprep.subr.mxu0 0.0
    %92 = vmatpush1.msra.mxu0 0.0
    %93 = vmatprep.subr.mxu0 0.0
    %94 = vmatpush1.msra.mxu0 0.0
    %95 = vmatprep.subr.mxu0 0.0
    %96 = vmatpush1.msra.mxu0 0.0
    %97 = vmatprep.subr.mxu0 0.0
    %98 = vmatpush1.msra.mxu0 0.0
    %99 = vmatprep.subr.mxu0 0.0
    %100 = vmatpush1.msra.mxu0 0.0
    %101 = vmatprep.subr.mxu0 0.0
    %102 = vmatpush1.msra.mxu0 0.0
    %103 = vmatprep.subr.mxu0 0.0
    %104 = vmatpush1.msra.mxu0 0.0
    %105 = vmatprep.subr.mxu0 0.0
    %106 = vmatpush1.msra.mxu0 0.0
    %107 = vmatprep.subr.mxu0 0.0
    %108 = vmatpush1.msra.mxu0 0.0
    %109 = vmatprep.subr.mxu0 0.0
    %110 = vmatpush1.msra.mxu0 0.0
    %111 = vmatprep.subr.mxu0 0.0
    %112 = vmatpush1.msra.mxu0 0.0
    %113 = vmatprep.subr.mxu0 0.0
    %114 = vmatpush1.msra.mxu0 0.0
    %115 = vmatprep.subr.mxu0 0.0
    %116 = vmatpush1.msra.mxu0 0.0
    %117 = vmatprep.subr.mxu0 0.0
    %118 = vmatpush1.msra.mxu0 0.0
    %119 = vmatprep.subr.mxu0 0.0
    %120 = vmatpush1.msra.mxu0 0.0
    %121 = vmatprep.subr.mxu0 0.0
    %122 = vmatpush1.msra.mxu0 0.0
    %123 = vmatprep.subr.mxu0 0.0
    %124 = vmatpush1.msra.mxu0 0.0
    %125 = vmatprep.subr.mxu0 0.0
    %126 = vmatpush1.msra.mxu0 0.0
    %127 = vmatprep.subr.mxu0 0.0
    %128 = vmatpush1.msra.mxu0 0.0
    %129 = vmatprep.subr.mxu0 0.0
    %130 = vmatpush1.msra.mxu0 0.0
    %131 = vmatprep.subr.mxu0 0.0
    %132 = vmatpush1.msra.mxu0 0.0
    %133 = vmatprep.subr.mxu0 0.0
    %134 = vmatpush1.msra.mxu0 0.0
    %135 = vmatprep.mubr.f32.mxu0 0.0
    %136 = vmatmul.mubr.f32.gmra.mrb[0].mxu0 %v69
    %v137 = vpop.f32.mrb[0].mxu0
    %v138 = vadd.f32 %v65, %v137
    %v139 = vpop.f32.mrb[0].mxu0
    %140 = vdwg.mxu0
    %v141 = vtanh.pop %v138
    %v142 = vld [vmem:[#allocation7] sm:$0xff]
    %v143 = vld [vmem:[#allocation7 + $0x8] sm:$0xff]
    %v144 = vld [vmem:[#allocation7 + $0x10] sm:$0xff]
    %v145 = vld [vmem:[#allocation7 + $0x18] sm:$0xff]
    %v146 = vld [vmem:[#allocation7 + $0x20] sm:$0xff]
    %v147 = vld [vmem:[#allocation7 + $0x28] sm:$0xff]
    %v148 = vld [vmem:[#allocation7 + $0x30] sm:$0xff]
    %v149 = vld [vmem:[#allocation7 + $0x38] sm:$0xff]
    %v150 = vld [vmem:[#allocation7 + $0x40] sm:$0xff]
    %v151 = vld [vmem:[#allocation7 + $0x48] sm:$0xff]
    %v152 = vld [vmem:[#allocation7 + $0x50] sm:$0xff]
    %v153 = vld [vmem:[#allocation7 + $0x58] sm:$0xff]
    %v154 = vld [vmem:[#allocation7 + $0x60] sm:$0xff]
    %v155 = vld [vmem:[#allocation7 + $0x68] sm:$0xff]
    %v156 = vld [vmem:[#allocation7 + $0x70] sm:$0xff]
    %v157 = vld [vmem:[#allocation7 + $0x78] sm:$0xff]
    %v158 = vld [vmem:[%s4] sm:$0x1]
    %v160 = vlaneseq
    %v161 = vshrl.u32 %v160, 7
    %v162 = vsub.s32 0, %v161
    %v163 = vrot.slane %v158, %v162
    %165 = vmatprep.subr.mxu0 0.0
    %166 = vmatpush1.msra.mxu0 %v142
    %167 = vmatprep.subr.mxu0 0.0
    %168 = vmatpush1.msra.mxu0 %v143
    %169 = vmatprep.subr.mxu0 0.0
    %170 = vmatpush1.msra.mxu0 %v144
    %171 = vmatprep.subr.mxu0 0.0
    %172 = vmatpush1.msra.mxu0 %v145
    %173 = vmatprep.subr.mxu0 0.0
    %174 = vmatpush1.msra.mxu0 %v146
    %175 = vmatprep.subr.mxu0 0.0
    %176 = vmatpush1.msra.mxu0 %v147
    %177 = vmatprep.subr.mxu0 0.0
    %178 = vmatpush1.msra.mxu0 %v148
    %179 = vmatprep.subr.mxu0 0.0
    %180 = vmatpush1.msra.mxu0 %v149
    %181 = vmatprep.subr.mxu0 0.0
    %182 = vmatpush1.msra.mxu0 %v150
    %183 = vmatprep.subr.mxu0 0.0
    %184 = vmatpush1.msra.mxu0 %v151
    %185 = vmatprep.subr.mxu0 0.0
    %186 = vmatpush1.msra.mxu0 %v152
    %187 = vmatprep.subr.mxu0 0.0
    %188 = vmatpush1.msra.mxu0 %v153
    %189 = vmatprep.subr.mxu0 0.0
    %190 = vmatpush1.msra.mxu0 %v154
    %191 = vmatprep.subr.mxu0 0.0
    %192 = vmatpush1.msra.mxu0 %v155
    %193 = vmatprep.subr.mxu0 0.0
    %194 = vmatpush1.msra.mxu0 %v156
    %195 = vmatprep.subr.mxu0 0.0
    %196 = vmatpush1.msra.mxu0 %v157
    %197 = vmatprep.subr.mxu0 0.0
    %198 = vmatpush1.msra.mxu0 0.0
    %199 = vmatprep.subr.mxu0 0.0
    %200 = vmatpush1.msra.mxu0 0.0
    %201 = vmatprep.subr.mxu0 0.0
    %202 = vmatpush1.msra.mxu0 0.0
    %203 = vmatprep.subr.mxu0 0.0
    %204 = vmatpush1.msra.mxu0 0.0
    %205 = vmatprep.subr.mxu0 0.0
    %206 = vmatpush1.msra.mxu0 0.0
    %207 = vmatprep.subr.mxu0 0.0
    %208 = vmatpush1.msra.mxu0 0.0
    %209 = vmatprep.subr.mxu0 0.0
    %210 = vmatpush1.msra.mxu0 0.0
    %211 = vmatprep.subr.mxu0 0.0
    %212 = vmatpush1.msra.mxu0 0.0
    %213 = vmatprep.subr.mxu0 0.0
    %214 = vmatpush1.msra.mxu0 0.0
    %215 = vmatprep.subr.mxu0 0.0
    %216 = vmatpush1.msra.mxu0 0.0
    %217 = vmatprep.subr.mxu0 0.0
    %218 = vmatpush1.msra.mxu0 0.0
    %219 = vmatprep.subr.mxu0 0.0
    %220 = vmatpush1.msra.mxu0 0.0
    %221 = vmatprep.subr.mxu0 0.0
    %222 = vmatpush1.msra.mxu0 0.0
    %223 = vmatprep.subr.mxu0 0.0
    %224 = vmatpush1.msra.mxu0 0.0
    %225 = vmatprep.subr.mxu0 0.0
    %226 = vmatpush1.msra.mxu0 0.0
    %227 = vmatprep.subr.mxu0 0.0
    %228 = vmatpush1.msra.mxu0 0.0
    %229 = vmatprep.mubr.f32.mxu0 0.0
    %230 = vmatmul.mubr.f32.gmra.mrb[0].mxu0 %v141
    %v231 = vpop.f32.mrb[0].mxu0
    %v232 = vadd.f32 %v163, %v231
    %v233 = vpop.f32.mrb[0].mxu0
    %234 = vdwg.mxu0
    %235 = vst [vmem:[#allocation8] sm:$0xff] %v232
    // Predicated region
    $region34: #{tpu_custom_call.1} parent=1 // pred_check
      _
    $region35: #{tpu_custom_call.1} parent=1 // pred_check_branch
      %237 = sbr.rel (0) target = $region37
    $region36: #{tpu_custom_call.1} parent=1 // pred_region
      %s239 = ssub.s32 128, 128
      %240 = vsyncadd [#allocation4], %s239
      %s242 = sshll.u32 [#allocation8], 4
      %s243 = int_to_ptr.vmem [resolvable:$true] %s242
      %245 = dma.vmem_to_hbm [thread:$0]  %s243, 128, %s5, [#allocation4]
    $region37: #{tpu_custom_call.1} parent=1 // pred_fallthru
      _
    // Predicated region
    $region38: #{tpu_custom_call.1} parent=1 // pred_check
      _
    $region39: #{tpu_custom_call.1} parent=1 // pred_check_branch
      %247 = sbr.rel (0) target = $region41
    $region40: #{tpu_custom_call.1} parent=1 // pred_region
      %248 = dma.done [#allocation4], 128
    $region41: #{tpu_custom_call.1} parent=1 // pred_fallthru
      _
    %249 = vsyncpa [#allocation3], 1
    %250 = vsyncpa [#allocation6], 1
    %251 = vsyncpa [#allocation4], 1

</llo_original>
